<compile_context>
chip_gen: v6e
topology: v6e:2x2x1
jax: 0.10.0
libtpu: 0.0.40
codegen_flags: <defaults>
</compile_context>

<pallas_src>
import functools

import numpy as np
import jax
import jax.numpy as jnp
from jax.experimental import pallas as pl
from jax.experimental.pallas import tpu as pltpu


# ----------------------- synthetic labelmap (mirrors the module's expectations) --------------
class LabelMap:
    levels = [2, 4, 8]
    level_names = ["family", "genus", "species"]
    n_classes = 14
    # child_of_<level_name>_ix : parent local index -> list of child local indices (next level)
    child_of_family_ix = {0: [0, 1], 1: [2, 3]}
    child_of_genus_ix = {0: [0, 1], 1: [2, 3], 2: [4, 5], 3: [6, 7]}


labelmap = LabelMap()

# level_start / level_stop exactly as in the PyTorch __init__
level_start, level_stop = [], []
for level_id, level_len in enumerate(labelmap.levels):
    if level_id == 0:
        level_start.append(0)
        level_stop.append(level_len)
    else:
        level_start.append(level_stop[level_id - 1])
        level_stop.append(level_stop[level_id - 1] + level_len)
N_CLASSES = labelmap.n_classes
LAST_LO, LAST_HI = level_start[-1], level_stop[-1]

# One entry per nn.Linear in module_dict (insertion order):
#   (tuple of GLOBAL class columns of that group, global column of the parent or -1)
GROUPS = [(tuple(range(level_start[0], level_stop[0])), -1)]
for level_id, level_name in enumerate(labelmap.level_names):
    if level_id == 0:
        continue
    child_of = getattr(labelmap, "child_of_{}_ix".format(labelmap.level_names[level_id - 1]))
    for parent_id, children in child_of.items():
        cols = tuple(level_start[level_id] + c for c in children)
        GROUPS.append((cols, level_start[level_id - 1] + parent_id))
GROUPS = tuple(GROUPS)

C_PAD = 128  # lane-dense padded class dimension


# ----------------------------------- Pallas kernel -------------------------------------------
def _hsoftmax_kernel(x_ref, w_ref, b_ref, out_ref, *, groups, c_pad):
    # Fused Linear over all hierarchy nodes: bf16 operands on the MXU, f32 accumulation.
    logits = jnp.dot(x_ref[...], w_ref[...], preferred_element_type=jnp.float32)
    logits = logits + b_ref[...]                                   # (TB, C_PAD) f32

    col = jax.lax.broadcasted_iota(jnp.int32, (1, c_pad), 1)

    # Static per-group lane masks from baked hierarchy metadata (built once at trace time).
    masks = []
    for cols, _ in groups:
        m = col == cols[0]
        for c in cols[1:]:
            m = jnp.logical_or(m, col == c)
        masks.append(m)

    neg = jnp.float32(-3.0e38)

    # Per-column max of its own group (stable log_softmax) — XLU reductions + selects only.
    gmax = jnp.zeros_like(logits)
    for m in masks:
        g = jnp.max(jnp.where(m, logits, neg), axis=-1, keepdims=True)   # (TB, 1)
        gmax = jnp.where(m, g, gmax)

    sh = logits - gmax            # <= 0 on every real class column; 0 on padded columns
    e = jnp.exp(sh)               # single exp for ALL groups (no overflow possible)

    # Per-group denominators, broadcast back onto member columns.
    denom = jnp.ones_like(logits)
    for m in masks:
        s = jnp.sum(jnp.where(m, e, 0.0), axis=-1, keepdims=True)        # (TB, 1)
        denom = jnp.where(m, s, denom)

    cond = sh - jnp.log(denom)    # single log for ALL groups; padded columns stay finite

    # Hierarchical accumulation (level order): child log-prob += parent's accumulated
    # log-prob.  Parent value is gathered with an exact one-hot masked reduce (f32 exact).
    all_lp = cond
    for m, (_, parent) in zip(masks, groups):
        if parent < 0:
            continue
        pval = jnp.sum(jnp.where(col == parent, all_lp, 0.0), axis=-1, keepdims=True)
        all_lp = jnp.where(m, cond + pval, all_lp)

    out_ref[...] = all_lp


def _round_up(v, m):
    return ((v + m - 1) // m) * m


def hierarchical_softmax(x, W, b, *, block_b=4096):
    """x: (B, D) f32, W: (D, n_classes) f32, b: (n_classes,) f32
       -> (all_log_probs (B, n_classes), last-level log_probs)."""
    B, D = x.shape

    # Large batch tile (amortizes ~0.35us/grid-step), multiple of 16 for bf16 sublane packing.
    TB = min(_round_up(block_b, 16), _round_up(max(B, 1), 16))
    B_pad = _round_up(B, TB)

    # bf16 MXU operands (halves HBM traffic for x); all softmax math stays f32 in-kernel.
    x_p = jnp.pad(x.astype(jnp.bfloat16), ((0, B_pad - B), (0, 0)))
    W_p = jnp.pad(W.astype(jnp.bfloat16), ((0, 0), (0, C_PAD - N_CLASSES)))
    b_p = jnp.pad(b.astype(jnp.float32).reshape(1, -1), ((0, 0), (0, C_PAD - N_CLASSES)))

    grid = (B_pad // TB,)

    # Explicit VMEM budget with headroom (v7x has only 64 MiB physical VMEM).
    est = (2 * TB * D * 2                 # x tile, double-buffered (bf16)
           + 2 * TB * C_PAD * 4           # out tile, double-buffered (f32)
           + D * C_PAD * 2 + C_PAD * 4    # resident fused weight + bias
           + 8 * TB * C_PAD * 4)          # in-kernel f32 temporaries headroom
    vmem_limit = int(min(max(est, 8 << 20), 48 << 20))

    kernel = functools.partial(_hsoftmax_kernel, groups=GROUPS, c_pad=C_PAD)

    out = pl.pallas_call(
        kernel,
        out_shape=jax.ShapeDtypeStruct((B_pad, C_PAD), jnp.float32),
        grid=grid,
        in_specs=[
            pl.BlockSpec((TB, D), lambda i: (i, 0)),      # x: streamed over the batch grid
            pl.BlockSpec((D, C_PAD), lambda i: (0, 0)),   # W: VMEM-resident across steps
            pl.BlockSpec((1, C_PAD), lambda i: (0, 0)),   # bias: VMEM-resident across steps
        ],
        out_specs=pl.BlockSpec((TB, C_PAD), lambda i: (i, 0)),
        compiler_params=pltpu.CompilerParams(
            dimension_semantics=("parallel",),            # megacore sharding on v7x
            vmem_limit_bytes=vmem_limit,
        ),
    )(x_p, W_p, b_p)

    all_lp = out[:B, :N_CLASSES]
    return all_lp, all_lp[:, LAST_LO:LAST_HI]


# ------------------------------- pure-numpy reference ----------------------------------------
def reference(x, W, b):
    logits = np.asarray(x, np.float32) @ np.asarray(W, np.float32) + np.asarray(b, np.float32)
    cond = np.zeros_like(logits)
    for cols, _ in GROUPS:
        cols = list(cols)
        l = logits[:, cols]
        l = l - l.max(axis=1, keepdims=True)
        cond[:, cols] = l - np.log(np.exp(l).sum(axis=1, keepdims=True))
    all_lp = cond.copy()
    for cols, parent in GROUPS:              # level order, parents already accumulated
        if parent < 0:
            continue
        cols = list(cols)
        all_lp[:, cols] = cond[:, cols] + all_lp[:, parent:parent + 1]
    return all_lp, all_lp[:, LAST_LO:LAST_HI]


# --------------------------------------- main ------------------------------------------------
if __name__ == "__main__":
    B = 2          # batch
    D = 32         # input_size (penultimate layer width)

    key = jax.random.PRNGKey(0)
    key, kx = jax.random.split(key)
    x = jax.random.normal(kx, (B, D), dtype=jnp.float32)

    # Deterministic per-group Linear params (one nn.Linear per group), fused into one
    # (D, n_classes) weight + (n_classes,) bias placed at each group's global columns.
    k = 1.0 / np.sqrt(D)
    W = np.zeros((D, N_CLASSES), dtype=np.float32)
    b = np.zeros((N_CLASSES,), dtype=np.float32)
    for cols, _ in GROUPS:
        cols = list(cols)
        key, kw, kb = jax.random.split(key, 3)
        W[:, cols] = np.asarray(jax.random.uniform(kw, (D, len(cols)), minval=-k, maxval=k))
        b[cols] = np.asarray(jax.random.uniform(kb, (len(cols),), minval=-k, maxval=k))

    W_j = jnp.asarray(W)
    b_j = jnp.asarray(b)

    all_lp, last_lp = hierarchical_softmax(x, W_j, b_j)
    all_lp = jax.block_until_ready(all_lp)
    last_lp = jax.block_until_ready(last_lp)

    # Reference uses the same bf16-rounded x/W that the kernel feeds the MXU, so the
    # comparison stays an all-f32 path and we can keep a tight tolerance.
    x_r = np.asarray(jnp.asarray(x).astype(jnp.bfloat16).astype(jnp.float32))
    W_r = np.asarray(W_j.astype(jnp.bfloat16).astype(jnp.float32))
    ref_all, ref_last = reference(x_r, W_r, b)

    np.testing.assert_allclose(np.asarray(all_lp), ref_all, rtol=1e-4, atol=1e-5)
    np.testing.assert_allclose(np.asarray(last_lp), ref_last, rtol=1e-4, atol=1e-5)

    print("KERNEL_OK")
</pallas_src>

<mosaic_0001>
module attributes {stable_mosaic.version = 11 : i64} {
  func.func @_hsoftmax_kernel(%arg0: i32, %arg1: memref<16x32xbf16, #tpu.memory_space<vmem>>, %arg2: memref<32x128xbf16, #tpu.memory_space<vmem>>, %arg3: memref<1x128xf32, #tpu.memory_space<vmem>>, %arg4: memref<16x128xf32, #tpu.memory_space<vmem>>) attributes {dimension_semantics = [#tpu.dimension_semantics<parallel>], iteration_bounds = array<i64: 1>, scalar_prefetch = 0 : i64, scratch_operands = 0 : i64, tpu.core_type = #tpu.core_type<tc>, window_params = [{transform_indices = @transform_0, window_bounds = array<i64: 16, 32>}, {pipeline_mode = #tpu.pipeline_mode<synchronous>, transform_indices = @transform_1, window_bounds = array<i64: 32, 128>}, {pipeline_mode = #tpu.pipeline_mode<synchronous>, transform_indices = @transform_2, window_bounds = array<i64: 1, 128>}, {transform_indices = @transform_3, window_bounds = array<i64: 16, 128>}]} {
    %c0 = arith.constant 0 : index
    %c0_0 = arith.constant 0 : index
    %0 = vector.load %arg1[%c0, %c0_0] : memref<16x32xbf16, #tpu.memory_space<vmem>>, vector<16x32xbf16>
    %c0_1 = arith.constant 0 : index
    %c0_2 = arith.constant 0 : index
    %1 = vector.load %arg2[%c0_1, %c0_2] : memref<32x128xbf16, #tpu.memory_space<vmem>>, vector<32x128xbf16>
    %cst = arith.constant dense<0.000000e+00> : vector<16x128xf32>
    %2 = tpu.matmul %0, %1, %cst {dimension_numbers = #tpu.dot_dimension_numbers<[1], [0], [0], [1], [0, 0, 1, 1], [], []>} : vector<16x32xbf16>, vector<32x128xbf16>, vector<16x128xf32> -> vector<16x128xf32>
    %c0_3 = arith.constant 0 : index
    %c0_4 = arith.constant 0 : index
    %3 = vector.load %arg3[%c0_3, %c0_4] : memref<1x128xf32, #tpu.memory_space<vmem>>, vector<1x128xf32>
    %4 = vector.broadcast %3 : vector<1x128xf32> to vector<16x128xf32>
    %5 = arith.addf %2, %4 : vector<16x128xf32>
    %6 = tpu.iota {dimensions = array<i32: 1>} : vector<1x128xi32>
    %c0_i32 = arith.constant 0 : i32
    %7 = vector.broadcast %c0_i32 : i32 to vector<1x128xi32>
    %8 = arith.cmpi eq, %6, %7 : vector<1x128xi32>
    %c1_i32 = arith.constant 1 : i32
    %9 = vector.broadcast %c1_i32 : i32 to vector<1x128xi32>
    %10 = arith.cmpi eq, %6, %9 : vector<1x128xi32>
    %11 = arith.ori %8, %10 : vector<1x128xi1>
    %c2_i32 = arith.constant 2 : i32
    %12 = vector.broadcast %c2_i32 : i32 to vector<1x128xi32>
    %13 = arith.cmpi eq, %6, %12 : vector<1x128xi32>
    %c3_i32 = arith.constant 3 : i32
    %14 = vector.broadcast %c3_i32 : i32 to vector<1x128xi32>
    %15 = arith.cmpi eq, %6, %14 : vector<1x128xi32>
    %16 = arith.ori %13, %15 : vector<1x128xi1>
    %c4_i32 = arith.constant 4 : i32
    %17 = vector.broadcast %c4_i32 : i32 to vector<1x128xi32>
    %18 = arith.cmpi eq, %6, %17 : vector<1x128xi32>
    %c5_i32 = arith.constant 5 : i32
    %19 = vector.broadcast %c5_i32 : i32 to vector<1x128xi32>
    %20 = arith.cmpi eq, %6, %19 : vector<1x128xi32>
    %21 = arith.ori %18, %20 : vector<1x128xi1>
    %c6_i32 = arith.constant 6 : i32
    %22 = vector.broadcast %c6_i32 : i32 to vector<1x128xi32>
    %23 = arith.cmpi eq, %6, %22 : vector<1x128xi32>
    %c7_i32 = arith.constant 7 : i32
    %24 = vector.broadcast %c7_i32 : i32 to vector<1x128xi32>
    %25 = arith.cmpi eq, %6, %24 : vector<1x128xi32>
    %26 = arith.ori %23, %25 : vector<1x128xi1>
    %c8_i32 = arith.constant 8 : i32
    %27 = vector.broadcast %c8_i32 : i32 to vector<1x128xi32>
    %28 = arith.cmpi eq, %6, %27 : vector<1x128xi32>
    %c9_i32 = arith.constant 9 : i32
    %29 = vector.broadcast %c9_i32 : i32 to vector<1x128xi32>
    %30 = arith.cmpi eq, %6, %29 : vector<1x128xi32>
    %31 = arith.ori %28, %30 : vector<1x128xi1>
    %c10_i32 = arith.constant 10 : i32
    %32 = vector.broadcast %c10_i32 : i32 to vector<1x128xi32>
    %33 = arith.cmpi eq, %6, %32 : vector<1x128xi32>
    %c11_i32 = arith.constant 11 : i32
    %34 = vector.broadcast %c11_i32 : i32 to vector<1x128xi32>
    %35 = arith.cmpi eq, %6, %34 : vector<1x128xi32>
    %36 = arith.ori %33, %35 : vector<1x128xi1>
    %c12_i32 = arith.constant 12 : i32
    %37 = vector.broadcast %c12_i32 : i32 to vector<1x128xi32>
    %38 = arith.cmpi eq, %6, %37 : vector<1x128xi32>
    %c13_i32 = arith.constant 13 : i32
    %39 = vector.broadcast %c13_i32 : i32 to vector<1x128xi32>
    %40 = arith.cmpi eq, %6, %39 : vector<1x128xi32>
    %41 = arith.ori %38, %40 : vector<1x128xi1>
    %cst_5 = arith.constant 0.000000e+00 : f32
    %42 = vector.broadcast %cst_5 : f32 to vector<16x128xf32>
    %cst_6 = arith.constant -3.000000e+38 : f32
    %43 = vector.shape_cast %11 : vector<1x128xi1> to vector<1x128xi1>
    %44 = vector.broadcast %43 : vector<1x128xi1> to vector<16x128xi1>
    %45 = vector.broadcast %cst_6 : f32 to vector<16x128xf32>
    %46 = arith.select %44, %5, %45 : vector<16x128xi1>, vector<16x128xf32>
    %cst_7 = arith.constant dense<0xFF800000> : vector<16xf32>
    %47 = vector.multi_reduction <maximumf>, %46, %cst_7 [1] : vector<16x128xf32> to vector<16xf32>
    %48 = vector.shape_cast %47 : vector<16xf32> to vector<16x1xf32>
    %49 = vector.shape_cast %11 : vector<1x128xi1> to vector<1x128xi1>
    %50 = vector.broadcast %49 : vector<1x128xi1> to vector<16x128xi1>
    %51 = vector.shape_cast %48 : vector<16x1xf32> to vector<16x1xf32>
    %52 = vector.broadcast %51 : vector<16x1xf32> to vector<16x128xf32>
    %53 = arith.select %50, %52, %42 : vector<16x128xi1>, vector<16x128xf32>
    %cst_8 = arith.constant -3.000000e+38 : f32
    %54 = vector.shape_cast %16 : vector<1x128xi1> to vector<1x128xi1>
    %55 = vector.broadcast %54 : vector<1x128xi1> to vector<16x128xi1>
    %56 = vector.broadcast %cst_8 : f32 to vector<16x128xf32>
    %57 = arith.select %55, %5, %56 : vector<16x128xi1>, vector<16x128xf32>
    %cst_9 = arith.constant dense<0xFF800000> : vector<16xf32>
    %58 = vector.multi_reduction <maximumf>, %57, %cst_9 [1] : vector<16x128xf32> to vector<16xf32>
    %59 = vector.shape_cast %58 : vector<16xf32> to vector<16x1xf32>
    %60 = vector.shape_cast %16 : vector<1x128xi1> to vector<1x128xi1>
    %61 = vector.broadcast %60 : vector<1x128xi1> to vector<16x128xi1>
    %62 = vector.shape_cast %59 : vector<16x1xf32> to vector<16x1xf32>
    %63 = vector.broadcast %62 : vector<16x1xf32> to vector<16x128xf32>
    %64 = arith.select %61, %63, %53 : vector<16x128xi1>, vector<16x128xf32>
    %cst_10 = arith.constant -3.000000e+38 : f32
    %65 = vector.shape_cast %21 : vector<1x128xi1> to vector<1x128xi1>
    %66 = vector.broadcast %65 : vector<1x128xi1> to vector<16x128xi1>
    %67 = vector.broadcast %cst_10 : f32 to vector<16x128xf32>
    %68 = arith.select %66, %5, %67 : vector<16x128xi1>, vector<16x128xf32>
    %cst_11 = arith.constant dense<0xFF800000> : vector<16xf32>
    %69 = vector.multi_reduction <maximumf>, %68, %cst_11 [1] : vector<16x128xf32> to vector<16xf32>
    %70 = vector.shape_cast %69 : vector<16xf32> to vector<16x1xf32>
    %71 = vector.shape_cast %21 : vector<1x128xi1> to vector<1x128xi1>
    %72 = vector.broadcast %71 : vector<1x128xi1> to vector<16x128xi1>
    %73 = vector.shape_cast %70 : vector<16x1xf32> to vector<16x1xf32>
    %74 = vector.broadcast %73 : vector<16x1xf32> to vector<16x128xf32>
    %75 = arith.select %72, %74, %64 : vector<16x128xi1>, vector<16x128xf32>
    %cst_12 = arith.constant -3.000000e+38 : f32
    %76 = vector.shape_cast %26 : vector<1x128xi1> to vector<1x128xi1>
    %77 = vector.broadcast %76 : vector<1x128xi1> to vector<16x128xi1>
    %78 = vector.broadcast %cst_12 : f32 to vector<16x128xf32>
    %79 = arith.select %77, %5, %78 : vector<16x128xi1>, vector<16x128xf32>
    %cst_13 = arith.constant dense<0xFF800000> : vector<16xf32>
    %80 = vector.multi_reduction <maximumf>, %79, %cst_13 [1] : vector<16x128xf32> to vector<16xf32>
    %81 = vector.shape_cast %80 : vector<16xf32> to vector<16x1xf32>
    %82 = vector.shape_cast %26 : vector<1x128xi1> to vector<1x128xi1>
    %83 = vector.broadcast %82 : vector<1x128xi1> to vector<16x128xi1>
    %84 = vector.shape_cast %81 : vector<16x1xf32> to vector<16x1xf32>
    %85 = vector.broadcast %84 : vector<16x1xf32> to vector<16x128xf32>
    %86 = arith.select %83, %85, %75 : vector<16x128xi1>, vector<16x128xf32>
    %cst_14 = arith.constant -3.000000e+38 : f32
    %87 = vector.shape_cast %31 : vector<1x128xi1> to vector<1x128xi1>
    %88 = vector.broadcast %87 : vector<1x128xi1> to vector<16x128xi1>
    %89 = vector.broadcast %cst_14 : f32 to vector<16x128xf32>
    %90 = arith.select %88, %5, %89 : vector<16x128xi1>, vector<16x128xf32>
    %cst_15 = arith.constant dense<0xFF800000> : vector<16xf32>
    %91 = vector.multi_reduction <maximumf>, %90, %cst_15 [1] : vector<16x128xf32> to vector<16xf32>
    %92 = vector.shape_cast %91 : vector<16xf32> to vector<16x1xf32>
    %93 = vector.shape_cast %31 : vector<1x128xi1> to vector<1x128xi1>
    %94 = vector.broadcast %93 : vector<1x128xi1> to vector<16x128xi1>
    %95 = vector.shape_cast %92 : vector<16x1xf32> to vector<16x1xf32>
    %96 = vector.broadcast %95 : vector<16x1xf32> to vector<16x128xf32>
    %97 = arith.select %94, %96, %86 : vector<16x128xi1>, vector<16x128xf32>
    %cst_16 = arith.constant -3.000000e+38 : f32
    %98 = vector.shape_cast %36 : vector<1x128xi1> to vector<1x128xi1>
    %99 = vector.broadcast %98 : vector<1x128xi1> to vector<16x128xi1>
    %100 = vector.broadcast %cst_16 : f32 to vector<16x128xf32>
    %101 = arith.select %99, %5, %100 : vector<16x128xi1>, vector<16x128xf32>
    %cst_17 = arith.constant dense<0xFF800000> : vector<16xf32>
    %102 = vector.multi_reduction <maximumf>, %101, %cst_17 [1] : vector<16x128xf32> to vector<16xf32>
    %103 = vector.shape_cast %102 : vector<16xf32> to vector<16x1xf32>
    %104 = vector.shape_cast %36 : vector<1x128xi1> to vector<1x128xi1>
    %105 = vector.broadcast %104 : vector<1x128xi1> to vector<16x128xi1>
    %106 = vector.shape_cast %103 : vector<16x1xf32> to vector<16x1xf32>
    %107 = vector.broadcast %106 : vector<16x1xf32> to vector<16x128xf32>
    %108 = arith.select %105, %107, %97 : vector<16x128xi1>, vector<16x128xf32>
    %cst_18 = arith.constant -3.000000e+38 : f32
    %109 = vector.shape_cast %41 : vector<1x128xi1> to vector<1x128xi1>
    %110 = vector.broadcast %109 : vector<1x128xi1> to vector<16x128xi1>
    %111 = vector.broadcast %cst_18 : f32 to vector<16x128xf32>
    %112 = arith.select %110, %5, %111 : vector<16x128xi1>, vector<16x128xf32>
    %cst_19 = arith.constant dense<0xFF800000> : vector<16xf32>
    %113 = vector.multi_reduction <maximumf>, %112, %cst_19 [1] : vector<16x128xf32> to vector<16xf32>
    %114 = vector.shape_cast %113 : vector<16xf32> to vector<16x1xf32>
    %115 = vector.shape_cast %41 : vector<1x128xi1> to vector<1x128xi1>
    %116 = vector.broadcast %115 : vector<1x128xi1> to vector<16x128xi1>
    %117 = vector.shape_cast %114 : vector<16x1xf32> to vector<16x1xf32>
    %118 = vector.broadcast %117 : vector<16x1xf32> to vector<16x128xf32>
    %119 = arith.select %116, %118, %108 : vector<16x128xi1>, vector<16x128xf32>
    %120 = arith.subf %5, %119 : vector<16x128xf32>
    %121 = math.exp %120 : vector<16x128xf32>
    %cst_20 = arith.constant 1.000000e+00 : f32
    %122 = vector.broadcast %cst_20 : f32 to vector<16x128xf32>
    %cst_21 = arith.constant 0.000000e+00 : f32
    %123 = vector.shape_cast %11 : vector<1x128xi1> to vector<1x128xi1>
    %124 = vector.broadcast %123 : vector<1x128xi1> to vector<16x128xi1>
    %125 = vector.broadcast %cst_21 : f32 to vector<16x128xf32>
    %126 = arith.select %124, %121, %125 : vector<16x128xi1>, vector<16x128xf32>
    %cst_22 = arith.constant dense<0.000000e+00> : vector<16xf32>
    %127 = vector.multi_reduction <add>, %126, %cst_22 [1] : vector<16x128xf32> to vector<16xf32>
    %128 = vector.shape_cast %127 : vector<16xf32> to vector<16x1xf32>
    %129 = vector.shape_cast %11 : vector<1x128xi1> to vector<1x128xi1>
    %130 = vector.broadcast %129 : vector<1x128xi1> to vector<16x128xi1>
    %131 = vector.shape_cast %128 : vector<16x1xf32> to vector<16x1xf32>
    %132 = vector.broadcast %131 : vector<16x1xf32> to vector<16x128xf32>
    %133 = arith.select %130, %132, %122 : vector<16x128xi1>, vector<16x128xf32>
    %cst_23 = arith.constant 0.000000e+00 : f32
    %134 = vector.shape_cast %16 : vector<1x128xi1> to vector<1x128xi1>
    %135 = vector.broadcast %134 : vector<1x128xi1> to vector<16x128xi1>
    %136 = vector.broadcast %cst_23 : f32 to vector<16x128xf32>
    %137 = arith.select %135, %121, %136 : vector<16x128xi1>, vector<16x128xf32>
    %cst_24 = arith.constant dense<0.000000e+00> : vector<16xf32>
    %138 = vector.multi_reduction <add>, %137, %cst_24 [1] : vector<16x128xf32> to vector<16xf32>
    %139 = vector.shape_cast %138 : vector<16xf32> to vector<16x1xf32>
    %140 = vector.shape_cast %16 : vector<1x128xi1> to vector<1x128xi1>
    %141 = vector.broadcast %140 : vector<1x128xi1> to vector<16x128xi1>
    %142 = vector.shape_cast %139 : vector<16x1xf32> to vector<16x1xf32>
    %143 = vector.broadcast %142 : vector<16x1xf32> to vector<16x128xf32>
    %144 = arith.select %141, %143, %133 : vector<16x128xi1>, vector<16x128xf32>
    %cst_25 = arith.constant 0.000000e+00 : f32
    %145 = vector.shape_cast %21 : vector<1x128xi1> to vector<1x128xi1>
    %146 = vector.broadcast %145 : vector<1x128xi1> to vector<16x128xi1>
    %147 = vector.broadcast %cst_25 : f32 to vector<16x128xf32>
    %148 = arith.select %146, %121, %147 : vector<16x128xi1>, vector<16x128xf32>
    %cst_26 = arith.constant dense<0.000000e+00> : vector<16xf32>
    %149 = vector.multi_reduction <add>, %148, %cst_26 [1] : vector<16x128xf32> to vector<16xf32>
    %150 = vector.shape_cast %149 : vector<16xf32> to vector<16x1xf32>
    %151 = vector.shape_cast %21 : vector<1x128xi1> to vector<1x128xi1>
    %152 = vector.broadcast %151 : vector<1x128xi1> to vector<16x128xi1>
    %153 = vector.shape_cast %150 : vector<16x1xf32> to vector<16x1xf32>
    %154 = vector.broadcast %153 : vector<16x1xf32> to vector<16x128xf32>
    %155 = arith.select %152, %154, %144 : vector<16x128xi1>, vector<16x128xf32>
    %cst_27 = arith.constant 0.000000e+00 : f32
    %156 = vector.shape_cast %26 : vector<1x128xi1> to vector<1x128xi1>
    %157 = vector.broadcast %156 : vector<1x128xi1> to vector<16x128xi1>
    %158 = vector.broadcast %cst_27 : f32 to vector<16x128xf32>
    %159 = arith.select %157, %121, %158 : vector<16x128xi1>, vector<16x128xf32>
    %cst_28 = arith.constant dense<0.000000e+00> : vector<16xf32>
    %160 = vector.multi_reduction <add>, %159, %cst_28 [1] : vector<16x128xf32> to vector<16xf32>
    %161 = vector.shape_cast %160 : vector<16xf32> to vector<16x1xf32>
    %162 = vector.shape_cast %26 : vector<1x128xi1> to vector<1x128xi1>
    %163 = vector.broadcast %162 : vector<1x128xi1> to vector<16x128xi1>
    %164 = vector.shape_cast %161 : vector<16x1xf32> to vector<16x1xf32>
    %165 = vector.broadcast %164 : vector<16x1xf32> to vector<16x128xf32>
    %166 = arith.select %163, %165, %155 : vector<16x128xi1>, vector<16x128xf32>
    %cst_29 = arith.constant 0.000000e+00 : f32
    %167 = vector.shape_cast %31 : vector<1x128xi1> to vector<1x128xi1>
    %168 = vector.broadcast %167 : vector<1x128xi1> to vector<16x128xi1>
    %169 = vector.broadcast %cst_29 : f32 to vector<16x128xf32>
    %170 = arith.select %168, %121, %169 : vector<16x128xi1>, vector<16x128xf32>
    %cst_30 = arith.constant dense<0.000000e+00> : vector<16xf32>
    %171 = vector.multi_reduction <add>, %170, %cst_30 [1] : vector<16x128xf32> to vector<16xf32>
    %172 = vector.shape_cast %171 : vector<16xf32> to vector<16x1xf32>
    %173 = vector.shape_cast %31 : vector<1x128xi1> to vector<1x128xi1>
    %174 = vector.broadcast %173 : vector<1x128xi1> to vector<16x128xi1>
    %175 = vector.shape_cast %172 : vector<16x1xf32> to vector<16x1xf32>
    %176 = vector.broadcast %175 : vector<16x1xf32> to vector<16x128xf32>
    %177 = arith.select %174, %176, %166 : vector<16x128xi1>, vector<16x128xf32>
    %cst_31 = arith.constant 0.000000e+00 : f32
    %178 = vector.shape_cast %36 : vector<1x128xi1> to vector<1x128xi1>
    %179 = vector.broadcast %178 : vector<1x128xi1> to vector<16x128xi1>
    %180 = vector.broadcast %cst_31 : f32 to vector<16x128xf32>
    %181 = arith.select %179, %121, %180 : vector<16x128xi1>, vector<16x128xf32>
    %cst_32 = arith.constant dense<0.000000e+00> : vector<16xf32>
    %182 = vector.multi_reduction <add>, %181, %cst_32 [1] : vector<16x128xf32> to vector<16xf32>
    %183 = vector.shape_cast %182 : vector<16xf32> to vector<16x1xf32>
    %184 = vector.shape_cast %36 : vector<1x128xi1> to vector<1x128xi1>
    %185 = vector.broadcast %184 : vector<1x128xi1> to vector<16x128xi1>
    %186 = vector.shape_cast %183 : vector<16x1xf32> to vector<16x1xf32>
    %187 = vector.broadcast %186 : vector<16x1xf32> to vector<16x128xf32>
    %188 = arith.select %185, %187, %177 : vector<16x128xi1>, vector<16x128xf32>
    %cst_33 = arith.constant 0.000000e+00 : f32
    %189 = vector.shape_cast %41 : vector<1x128xi1> to vector<1x128xi1>
    %190 = vector.broadcast %189 : vector<1x128xi1> to vector<16x128xi1>
    %191 = vector.broadcast %cst_33 : f32 to vector<16x128xf32>
    %192 = arith.select %190, %121, %191 : vector<16x128xi1>, vector<16x128xf32>
    %cst_34 = arith.constant dense<0.000000e+00> : vector<16xf32>
    %193 = vector.multi_reduction <add>, %192, %cst_34 [1] : vector<16x128xf32> to vector<16xf32>
    %194 = vector.shape_cast %193 : vector<16xf32> to vector<16x1xf32>
    %195 = vector.shape_cast %41 : vector<1x128xi1> to vector<1x128xi1>
    %196 = vector.broadcast %195 : vector<1x128xi1> to vector<16x128xi1>
    %197 = vector.shape_cast %194 : vector<16x1xf32> to vector<16x1xf32>
    %198 = vector.broadcast %197 : vector<16x1xf32> to vector<16x128xf32>
    %199 = arith.select %196, %198, %188 : vector<16x128xi1>, vector<16x128xf32>
    %200 = math.log %199 : vector<16x128xf32>
    %201 = arith.subf %120, %200 : vector<16x128xf32>
    %c0_i32_35 = arith.constant 0 : i32
    %202 = vector.broadcast %c0_i32_35 : i32 to vector<1x128xi32>
    %203 = arith.cmpi eq, %6, %202 : vector<1x128xi32>
    %cst_36 = arith.constant 0.000000e+00 : f32
    %204 = vector.shape_cast %203 : vector<1x128xi1> to vector<1x128xi1>
    %205 = vector.broadcast %204 : vector<1x128xi1> to vector<16x128xi1>
    %206 = vector.broadcast %cst_36 : f32 to vector<16x128xf32>
    %207 = arith.select %205, %201, %206 : vector<16x128xi1>, vector<16x128xf32>
    %cst_37 = arith.constant dense<0.000000e+00> : vector<16xf32>
    %208 = vector.multi_reduction <add>, %207, %cst_37 [1] : vector<16x128xf32> to vector<16xf32>
    %209 = vector.shape_cast %208 : vector<16xf32> to vector<16x1xf32>
    %210 = vector.broadcast %209 : vector<16x1xf32> to vector<16x128xf32>
    %211 = arith.addf %201, %210 : vector<16x128xf32>
    %212 = vector.shape_cast %16 : vector<1x128xi1> to vector<1x128xi1>
    %213 = vector.broadcast %212 : vector<1x128xi1> to vector<16x128xi1>
    %214 = arith.select %213, %211, %201 : vector<16x128xi1>, vector<16x128xf32>
    %c1_i32_38 = arith.constant 1 : i32
    %215 = vector.broadcast %c1_i32_38 : i32 to vector<1x128xi32>
    %216 = arith.cmpi eq, %6, %215 : vector<1x128xi32>
    %cst_39 = arith.constant 0.000000e+00 : f32
    %217 = vector.shape_cast %216 : vector<1x128xi1> to vector<1x128xi1>
    %218 = vector.broadcast %217 : vector<1x128xi1> to vector<16x128xi1>
    %219 = vector.broadcast %cst_39 : f32 to vector<16x128xf32>
    %220 = arith.select %218, %214, %219 : vector<16x128xi1>, vector<16x128xf32>
    %cst_40 = arith.constant dense<0.000000e+00> : vector<16xf32>
    %221 = vector.multi_reduction <add>, %220, %cst_40 [1] : vector<16x128xf32> to vector<16xf32>
    %222 = vector.shape_cast %221 : vector<16xf32> to vector<16x1xf32>
    %223 = vector.broadcast %222 : vector<16x1xf32> to vector<16x128xf32>
    %224 = arith.addf %201, %223 : vector<16x128xf32>
    %225 = vector.shape_cast %21 : vector<1x128xi1> to vector<1x128xi1>
    %226 = vector.broadcast %225 : vector<1x128xi1> to vector<16x128xi1>
    %227 = arith.select %226, %224, %214 : vector<16x128xi1>, vector<16x128xf32>
    %c2_i32_41 = arith.constant 2 : i32
    %228 = vector.broadcast %c2_i32_41 : i32 to vector<1x128xi32>
    %229 = arith.cmpi eq, %6, %228 : vector<1x128xi32>
    %cst_42 = arith.constant 0.000000e+00 : f32
    %230 = vector.shape_cast %229 : vector<1x128xi1> to vector<1x128xi1>
    %231 = vector.broadcast %230 : vector<1x128xi1> to vector<16x128xi1>
    %232 = vector.broadcast %cst_42 : f32 to vector<16x128xf32>
    %233 = arith.select %231, %227, %232 : vector<16x128xi1>, vector<16x128xf32>
    %cst_43 = arith.constant dense<0.000000e+00> : vector<16xf32>
    %234 = vector.multi_reduction <add>, %233, %cst_43 [1] : vector<16x128xf32> to vector<16xf32>
    %235 = vector.shape_cast %234 : vector<16xf32> to vector<16x1xf32>
    %236 = vector.broadcast %235 : vector<16x1xf32> to vector<16x128xf32>
    %237 = arith.addf %201, %236 : vector<16x128xf32>
    %238 = vector.shape_cast %26 : vector<1x128xi1> to vector<1x128xi1>
    %239 = vector.broadcast %238 : vector<1x128xi1> to vector<16x128xi1>
    %240 = arith.select %239, %237, %227 : vector<16x128xi1>, vector<16x128xf32>
    %c3_i32_44 = arith.constant 3 : i32
    %241 = vector.broadcast %c3_i32_44 : i32 to vector<1x128xi32>
    %242 = arith.cmpi eq, %6, %241 : vector<1x128xi32>
    %cst_45 = arith.constant 0.000000e+00 : f32
    %243 = vector.shape_cast %242 : vector<1x128xi1> to vector<1x128xi1>
    %244 = vector.broadcast %243 : vector<1x128xi1> to vector<16x128xi1>
    %245 = vector.broadcast %cst_45 : f32 to vector<16x128xf32>
    %246 = arith.select %244, %240, %245 : vector<16x128xi1>, vector<16x128xf32>
    %cst_46 = arith.constant dense<0.000000e+00> : vector<16xf32>
    %247 = vector.multi_reduction <add>, %246, %cst_46 [1] : vector<16x128xf32> to vector<16xf32>
    %248 = vector.shape_cast %247 : vector<16xf32> to vector<16x1xf32>
    %249 = vector.broadcast %248 : vector<16x1xf32> to vector<16x128xf32>
    %250 = arith.addf %201, %249 : vector<16x128xf32>
    %251 = vector.shape_cast %31 : vector<1x128xi1> to vector<1x128xi1>
    %252 = vector.broadcast %251 : vector<1x128xi1> to vector<16x128xi1>
    %253 = arith.select %252, %250, %240 : vector<16x128xi1>, vector<16x128xf32>
    %c4_i32_47 = arith.constant 4 : i32
    %254 = vector.broadcast %c4_i32_47 : i32 to vector<1x128xi32>
    %255 = arith.cmpi eq, %6, %254 : vector<1x128xi32>
    %cst_48 = arith.constant 0.000000e+00 : f32
    %256 = vector.shape_cast %255 : vector<1x128xi1> to vector<1x128xi1>
    %257 = vector.broadcast %256 : vector<1x128xi1> to vector<16x128xi1>
    %258 = vector.broadcast %cst_48 : f32 to vector<16x128xf32>
    %259 = arith.select %257, %253, %258 : vector<16x128xi1>, vector<16x128xf32>
    %cst_49 = arith.constant dense<0.000000e+00> : vector<16xf32>
    %260 = vector.multi_reduction <add>, %259, %cst_49 [1] : vector<16x128xf32> to vector<16xf32>
    %261 = vector.shape_cast %260 : vector<16xf32> to vector<16x1xf32>
    %262 = vector.broadcast %261 : vector<16x1xf32> to vector<16x128xf32>
    %263 = arith.addf %201, %262 : vector<16x128xf32>
    %264 = vector.shape_cast %36 : vector<1x128xi1> to vector<1x128xi1>
    %265 = vector.broadcast %264 : vector<1x128xi1> to vector<16x128xi1>
    %266 = arith.select %265, %263, %253 : vector<16x128xi1>, vector<16x128xf32>
    %c5_i32_50 = arith.constant 5 : i32
    %267 = vector.broadcast %c5_i32_50 : i32 to vector<1x128xi32>
    %268 = arith.cmpi eq, %6, %267 : vector<1x128xi32>
    %cst_51 = arith.constant 0.000000e+00 : f32
    %269 = vector.shape_cast %268 : vector<1x128xi1> to vector<1x128xi1>
    %270 = vector.broadcast %269 : vector<1x128xi1> to vector<16x128xi1>
    %271 = vector.broadcast %cst_51 : f32 to vector<16x128xf32>
    %272 = arith.select %270, %266, %271 : vector<16x128xi1>, vector<16x128xf32>
    %cst_52 = arith.constant dense<0.000000e+00> : vector<16xf32>
    %273 = vector.multi_reduction <add>, %272, %cst_52 [1] : vector<16x128xf32> to vector<16xf32>
    %274 = vector.shape_cast %273 : vector<16xf32> to vector<16x1xf32>
    %275 = vector.broadcast %274 : vector<16x1xf32> to vector<16x128xf32>
    %276 = arith.addf %201, %275 : vector<16x128xf32>
    %277 = vector.shape_cast %41 : vector<1x128xi1> to vector<1x128xi1>
    %278 = vector.broadcast %277 : vector<1x128xi1> to vector<16x128xi1>
    %279 = arith.select %278, %276, %266 : vector<16x128xi1>, vector<16x128xf32>
    %c0_53 = arith.constant 0 : index
    %c0_54 = arith.constant 0 : index
    %280 = vector.load %arg4[%c0_53, %c0_54] : memref<16x128xf32, #tpu.memory_space<vmem>>, vector<16x128xf32>
    tpu.vector_store %arg4[%c0_53, %c0_54], %279 {strides = array<i32>} : memref<16x128xf32, #tpu.memory_space<vmem>>, vector<16x128xf32>,
    return
  }
  func.func @transform_0(%arg0: i32) -> (i32, i32) {
    %c0_i32 = arith.constant 0 : i32
    %c0_i32_0 = arith.constant 0 : i32
    return %arg0, %c0_i32 : i32, i32
  }
  func.func @transform_1(%arg0: i32) -> (i32, i32) {
    %c0_i32 = arith.constant 0 : i32
    %c0_i32_0 = arith.constant 0 : i32
    %c0_i32_1 = arith.constant 0 : i32
    return %c0_i32, %c0_i32_0 : i32, i32
  }
  func.func @transform_2(%arg0: i32) -> (i32, i32) {
    %c0_i32 = arith.constant 0 : i32
    %c0_i32_0 = arith.constant 0 : i32
    %c0_i32_1 = arith.constant 0 : i32
    return %c0_i32, %c0_i32_0 : i32, i32
  }
  func.func @transform_3(%arg0: i32) -> (i32, i32) {
    %c0_i32 = arith.constant 0 : i32
    %c0_i32_0 = arith.constant 0 : i32
    return %arg0, %c0_i32 : i32, i32
  }
}

</mosaic_0001>

<llo_original>
// kernel: tpu_custom_call.1
$region0: #{tpu_custom_call.1}
  #allocation0 [shape = 'u32[]', space=smem, size = 0x4, offset = 0x4, fixed_abs, tag = 'smem constant byte address 0x4 - core index']
  #allocation1 [shape = 'u32[144,128]{1,0:T(1,128)}', space=vmem, size = 0x12000, scoped, tag = 'internal scratch']
  %s0 = inlined_call_operand.hbm [shape: bf16[16,32], index: 0, kind: input, shape index: {}]
  %s1 = inlined_call_operand.hbm [shape: bf16[32,128], index: 1, kind: input, shape index: {}]
  %s2 = inlined_call_operand.vmem [shape: f32[1,128], index: 2, kind: input, shape index: {}]
  %s3 = inlined_call_operand.hbm [shape: f32[16,128], index: 3, kind: output, shape index: {}]
  %s4 = sld [smem:[#allocation0]]
  $region30: #{tpu_custom_call.1} parent=0
    _
  %s6 = ssub.s32 1, %s4
  %s7 = scalar_select 0, %s6, %s4
  $region1: #{tpu_custom_call.1} parent=0
    #allocation2 [shape = 'u8[4096]{0}', space=vmem, size = 0x1000, scoped, tag = 'input window, operand 0, single buffered']
    #allocation3 [shape = 's32[1]{0}', space=sflag, size = 0x4, scoped, tag = 'scoped memory for tpu_custom_call.1']
    #allocation4 [shape = 's32[1]{0}', space=sflag, size = 0x4, scoped, tag = 'scoped memory for tpu_custom_call.1']
    #allocation5 [shape = 'u8[8192]{0}', space=vmem, size = 0x2000, scoped, tag = 'input window, operand 1, single buffered']
    #allocation6 [shape = 's32[1]{0}', space=sflag, size = 0x4, scoped, tag = 'scoped memory for tpu_custom_call.1']
    #allocation7 [shape = 'u8[8192]{0}', space=vmem, size = 0x2000, scoped, tag = 'output window, operand 0, single buffered']
    %8 = vsyncpa [#allocation3], 0
    %9 = vsyncpa [#allocation6], 0
    %10 = vsyncpa [#allocation4], 0
    // Predicated region
    $region2: #{tpu_custom_call.1} parent=1 // pred_check
      _
    $region3: #{tpu_custom_call.1} parent=1 // pred_check_branch
      %12 = sbr.rel (0) target = $region5
    $region4: #{tpu_custom_call.1} parent=1 // pred_region
      %s14 = ssub.s32 128, 128
      %15 = vsyncadd [#allocation3], %s14
      %s16 = sshll.u32 [#allocation2], 4
      %s17 = int_to_ptr.vmem [resolvable:$true] %s16
      %22 = dma.hbm_to_vmem [thread:$0]  %s0, 128, %s17, [#allocation3], 64, 64, 4
    $region5: #{tpu_custom_call.1} parent=1 // pred_fallthru
      _
    // Predicated region
    $region6: #{tpu_custom_call.1} parent=1 // pred_check
      _
    $region7: #{tpu_custom_call.1} parent=1 // pred_check_branch
      %24 = sbr.rel (0) target = $region9
    $region8: #{tpu_custom_call.1} parent=1 // pred_region
      %s26 = ssub.s32 256, 256
      %27 = vsyncadd [#allocation6], %s26
      %s28 = sshll.u32 [#allocation5], 4
      %s29 = int_to_ptr.vmem [resolvable:$true] %s28
      %34 = dma.hbm_to_vmem [thread:$0]  %s1, 256, %s29, [#allocation6], 64, 64, 4
    $region9: #{tpu_custom_call.1} parent=1 // pred_fallthru
      _
    // Predicated region
    $region10: #{tpu_custom_call.1} parent=1 // pred_check
      _
    $region11: #{tpu_custom_call.1} parent=1 // pred_check_branch
      %36 = sbr.rel (0) target = $region13
    $region12: #{tpu_custom_call.1} parent=1 // pred_region
      _
    $region13: #{tpu_custom_call.1} parent=1 // pred_fallthru
      _
    // Predicated region
    $region14: #{tpu_custom_call.1} parent=1 // pred_check
      _
    $region15: #{tpu_custom_call.1} parent=1 // pred_check_branch
      %38 = sbr.rel (0) target = $region17
    $region16: #{tpu_custom_call.1} parent=1 // pred_region
      %39 = dma.done [#allocation3], 128
    $region17: #{tpu_custom_call.1} parent=1 // pred_fallthru
      _
    // Predicated region
    $region18: #{tpu_custom_call.1} parent=1 // pred_check
      _
    $region19: #{tpu_custom_call.1} parent=1 // pred_check_branch
      %41 = sbr.rel (0) target = $region21
    $region20: #{tpu_custom_call.1} parent=1 // pred_region
      %42 = dma.done [#allocation6], 256
    $region21: #{tpu_custom_call.1} parent=1 // pred_fallthru
      _
    %v44 = vld [vmem:[#allocation2] sm:$0xf]
    %v45 = vld [vmem:[#allocation2 + $0x4] sm:$0xf]
    %v46 = vld [vmem:[#allocation5] sm:$0xf]
    %v47 = vld [vmem:[#allocation5 + $0x4] sm:$0xf]
    %v48 = vld [vmem:[#allocation5 + $0x8] sm:$0xf]
    %v49 = vld [vmem:[#allocation5 + $0xc] sm:$0xf]
    %v50 = vld [vmem:[%s2] sm:$0x1]
    %v52 = vlaneseq
    %v53 = vshrl.u32 %v52, 7
    %v54 = vsub.s32 0, %v53
    %v55 = vrot.slane %v50, %v54
    %v59 = vunpack.c.l.b16 %v44
    %v60 = vunpack.c.l.b16 %v45
    %v61 = vpack.c.b16 %v60, %v59
    %v66 = vunpack.c.l.b16 %v46
    %v67 = vunpack.c.l.b16 %v47
    %v68 = vunpack.c.l.b16 %v48
    %v69 = vunpack.c.l.b16 %v49
    %v70 = vpack.c.b16 %v67, %v66
    %v71 = vpack.c.b16 %v69, %v68
    %vm74 = vcmask 261120
    %v76 = vsel %vm74, %v61, 0
    %78 = vmatprep.subr.bf16.mxu0 0
    %79 = vmatpush1.bf16.msra.mxu0 0
    %80 = vmatprep.subr.bf16.mxu0 0
    %81 = vmatpush1.bf16.msra.mxu0 0
    %82 = vmatprep.subr.bf16.mxu0 0
    %83 = vmatpush1.bf16.msra.mxu0 0
    %84 = vmatprep.subr.bf16.mxu0 0
    %85 = vmatpush1.bf16.msra.mxu0 0
    %86 = vmatprep.subr.bf16.mxu0 0
    %87 = vmatpush1.bf16.msra.mxu0 0
    %88 = vmatprep.subr.bf16.mxu0 0
    %89 = vmatpush1.bf16.msra.mxu0 0
    %90 = vmatprep.subr.bf16.mxu0 0
    %91 = vmatpush1.bf16.msra.mxu0 %v71
    %92 = vmatprep.subr.bf16.mxu0 0
    %93 = vmatpush1.bf16.msra.mxu0 %v70
    %94 = vmatprep.subr.bf16.mxu0 0
    %95 = vmatpush2.bf16.msra.mxu0 0
    %96 = vmatprep.subr.bf16.mxu0 0
    %97 = vmatpush2.bf16.msra.mxu0 0
    %98 = vmatprep.subr.bf16.mxu0 0
    %99 = vmatpush2.bf16.msra.mxu0 0
    %100 = vmatprep.subr.bf16.mxu0 0
    %101 = vmatpush2.bf16.msra.mxu0 0
    %102 = vmatprep.subr.bf16.mxu0 0
    %103 = vmatpush2.bf16.msra.mxu0 0
    %104 = vmatprep.subr.bf16.mxu0 0
    %105 = vmatpush2.bf16.msra.mxu0 0
    %106 = vmatprep.subr.bf16.mxu0 0
    %107 = vmatpush2.bf16.msra.mxu0 0
    %108 = vmatprep.subr.bf16.mxu0 0
    %109 = vmatpush2.bf16.msra.mxu0 0
    %110 = vmatprep.mubr.bf16.mxu0 0
    %111 = vmatmul.mubr.bf16.gmra.mxu0 %v76
    %v112 = vpop.f32.mrf.mxu0
    %v113 = vadd.f32 %v55, %v112
    %v114 = vpop.f32.mrf.mxu0
    %v115 = vpop.f32.mrf.mxu0
    %v116 = vadd.f32 %v55, %v115
    %v117 = vpop.f32.mrf.mxu0
    %118 = vdwg.mxu0
    %v119 = vlaneseq
    %v120 = vand.u32 %v119, 127
    %vm121 = vcmp.eq.s32.totalorder %v120, 0
    %vm122 = vcmp.eq.s32.totalorder %v120, 1
    %vm123 = vmor %vm121, %vm122
    %vm124 = vcmp.eq.s32.totalorder %v120, 2
    %vm125 = vcmp.eq.s32.totalorder %v120, 3
    %vm126 = vmor %vm124, %vm125
    %vm127 = vcmp.eq.s32.totalorder %v120, 4
    %vm128 = vcmp.eq.s32.totalorder %v120, 5
    %vm129 = vmor %vm127, %vm128
    %vm130 = vcmp.eq.s32.totalorder %v120, 6
    %vm131 = vcmp.eq.s32.totalorder %v120, 7
    %vm132 = vmor %vm130, %vm131
    %vm133 = vcmp.eq.s32.totalorder %v120, 8
    %vm134 = vcmp.eq.s32.totalorder %v120, 9
    %vm135 = vmor %vm133, %vm134
    %vm136 = vcmp.eq.s32.totalorder %v120, 10
    %vm137 = vcmp.eq.s32.totalorder %v120, 11
    %vm138 = vmor %vm136, %vm137
    %vm139 = vcmp.eq.s32.totalorder %v120, 12
    %vm140 = vcmp.eq.s32.totalorder %v120, 13
    %vm141 = vmor %vm139, %vm140
    %v142 = vsel %vm123, 1, 0
    %vm143 = vcmp.eq.s32.totalorder %v142, 1
    %v144 = vsel %vm143, %v113, -3e+38
    %v145 = vsel %vm143, %v116, -3e+38
    %146 = vmax.xlane.f32.xlu0 %v144
    %v147 = vpop.xlane.xlu0 %146
    %148 = vmax.xlane.f32.xlu0 %v145
    %v149 = vpop.xlane.xlu0 %148
    %v150 = vsel %vm143, %v147, 0.0
    %v151 = vsel %vm143, %v149, 0.0
    %v152 = vsel %vm126, 1, 0
    %vm153 = vcmp.eq.s32.totalorder %v152, 1
    %v154 = vsel %vm153, %v113, -3e+38
    %v155 = vsel %vm153, %v116, -3e+38
    %156 = vmax.xlane.f32.xlu0 %v154
    %v157 = vpop.xlane.xlu0 %156
    %158 = vmax.xlane.f32.xlu0 %v155
    %v159 = vpop.xlane.xlu0 %158
    %v160 = vsel %vm153, %v157, %v150
    %v161 = vsel %vm153, %v159, %v151
    %v162 = vsel %vm129, 1, 0
    %vm163 = vcmp.eq.s32.totalorder %v162, 1
    %v164 = vsel %vm163, %v113, -3e+38
    %v165 = vsel %vm163, %v116, -3e+38
    %166 = vmax.xlane.f32.xlu0 %v164
    %v167 = vpop.xlane.xlu0 %166
    %168 = vmax.xlane.f32.xlu0 %v165
    %v169 = vpop.xlane.xlu0 %168
    %v170 = vsel %vm163, %v167, %v160
    %v171 = vsel %vm163, %v169, %v161
    %v172 = vsel %vm132, 1, 0
    %vm173 = vcmp.eq.s32.totalorder %v172, 1
    %v174 = vsel %vm173, %v113, -3e+38
    %v175 = vsel %vm173, %v116, -3e+38
    %176 = vmax.xlane.f32.xlu0 %v174
    %v177 = vpop.xlane.xlu0 %176
    %178 = vmax.xlane.f32.xlu0 %v175
    %v179 = vpop.xlane.xlu0 %178
    %v180 = vsel %vm173, %v177, %v170
    %v181 = vsel %vm173, %v179, %v171
    %v182 = vsel %vm135, 1, 0
    %vm183 = vcmp.eq.s32.totalorder %v182, 1
    %v184 = vsel %vm183, %v113, -3e+38
    %v185 = vsel %vm183, %v116, -3e+38
    %186 = vmax.xlane.f32.xlu0 %v184
    %v187 = vpop.xlane.xlu0 %186
    %188 = vmax.xlane.f32.xlu0 %v185
    %v189 = vpop.xlane.xlu0 %188
    %v190 = vsel %vm183, %v187, %v180
    %v191 = vsel %vm183, %v189, %v181
    %v192 = vsel %vm138, 1, 0
    %vm193 = vcmp.eq.s32.totalorder %v192, 1
    %v194 = vsel %vm193, %v113, -3e+38
    %v195 = vsel %vm193, %v116, -3e+38
    %196 = vmax.xlane.f32.xlu0 %v194
    %v197 = vpop.xlane.xlu0 %196
    %198 = vmax.xlane.f32.xlu0 %v195
    %v199 = vpop.xlane.xlu0 %198
    %v200 = vsel %vm193, %v197, %v190
    %v201 = vsel %vm193, %v199, %v191
    %v202 = vsel %vm141, 1, 0
    %vm203 = vcmp.eq.s32.totalorder %v202, 1
    %v204 = vsel %vm203, %v113, -3e+38
    %v205 = vsel %vm203, %v116, -3e+38
    %206 = vmax.xlane.f32.xlu0 %v204
    %v207 = vpop.xlane.xlu0 %206
    %208 = vmax.xlane.f32.xlu0 %v205
    %v209 = vpop.xlane.xlu0 %208
    %v210 = vsel %vm203, %v207, %v200
    %v211 = vsel %vm203, %v209, %v201
    %v212 = vsub.f32 %v113, %v210
    %v213 = vsub.f32 %v116, %v211
    %v214 = vmul.f32 %v212, 1.442695
    %v215 = vpow.pop %v214
    %v216 = vmul.f32 %v213, 1.442695
    %v217 = vpow.pop %v216
    %v218 = vsel %vm143, %v215, 0.0
    %v219 = vsel %vm143, %v217, 0.0
    %220 = vadd.xlane.f32.xlu0 %v218
    %v221 = vpop.xlane.xlu0 %220
    %222 = vadd.xlane.f32.xlu0 %v219
    %v223 = vpop.xlane.xlu0 %222
    %v224 = vsel %vm143, %v221, 1.0
    %v225 = vsel %vm143, %v223, 1.0
    %v226 = vsel %vm153, %v215, 0.0
    %v227 = vsel %vm153, %v217, 0.0
    %228 = vadd.xlane.f32.xlu0 %v226
    %v229 = vpop.xlane.xlu0 %228
    %230 = vadd.xlane.f32.xlu0 %v227
    %v231 = vpop.xlane.xlu0 %230
    %v232 = vsel %vm153, %v229, %v224
    %v233 = vsel %vm153, %v231, %v225
    %v234 = vsel %vm163, %v215, 0.0
    %v235 = vsel %vm163, %v217, 0.0
    %236 = vadd.xlane.f32.xlu0 %v234
    %v237 = vpop.xlane.xlu0 %236
    %238 = vadd.xlane.f32.xlu0 %v235
    %v239 = vpop.xlane.xlu0 %238
    %v240 = vsel %vm163, %v237, %v232
    %v241 = vsel %vm163, %v239, %v233
    %v242 = vsel %vm173, %v215, 0.0
    %v243 = vsel %vm173, %v217, 0.0
    %244 = vadd.xlane.f32.xlu0 %v242
    %v245 = vpop.xlane.xlu0 %244
    %246 = vadd.xlane.f32.xlu0 %v243
    %v247 = vpop.xlane.xlu0 %246
    %v248 = vsel %vm173, %v245, %v240
    %v249 = vsel %vm173, %v247, %v241
    %v250 = vsel %vm183, %v215, 0.0
    %v251 = vsel %vm183, %v217, 0.0
    %252 = vadd.xlane.f32.xlu0 %v250
    %v253 = vpop.xlane.xlu0 %252
    %254 = vadd.xlane.f32.xlu0 %v251
    %v255 = vpop.xlane.xlu0 %254
    %v256 = vsel %vm183, %v253, %v248
    %v257 = vsel %vm183, %v255, %v249
    %v258 = vsel %vm193, %v215, 0.0
    %v259 = vsel %vm193, %v217, 0.0
    %260 = vadd.xlane.f32.xlu0 %v258
    %v261 = vpop.xlane.xlu0 %260
    %262 = vadd.xlane.f32.xlu0 %v259
    %v263 = vpop.xlane.xlu0 %262
    %v264 = vsel %vm193, %v261, %v256
    %v265 = vsel %vm193, %v263, %v257
    %v266 = vsel %vm203, %v215, 0.0
    %v267 = vsel %vm203, %v217, 0.0
    %268 = vadd.xlane.f32.xlu0 %v266
    %v269 = vpop.xlane.xlu0 %268
    %270 = vadd.xlane.f32.xlu0 %v267
    %v271 = vpop.xlane.xlu0 %270
    %v272 = vsel %vm203, %v269, %v264
    %v273 = vsel %vm203, %v271, %v265
    %v274 = vlog2.pop %v272
    %v275 = vmul.f32 %v274, 0.6931472
    %v276 = vlog2.pop %v273
    %v277 = vmul.f32 %v276, 0.6931472
    %v278 = vsub.f32 %v212, %v275
    %v279 = vsub.f32 %v213, %v277
    %v280 = vsel %vm121, 1, 0
    %vm281 = vcmp.eq.s32.totalorder %v280, 1
    %v282 = vsel %vm281, %v278, 0.0
    %v283 = vsel %vm281, %v279, 0.0
    %284 = vadd.xlane.f32.xlu0 %v282
    %v285 = vpop.xlane.xlu0 %284
    %286 = vadd.xlane.f32.xlu0 %v283
    %v287 = vpop.xlane.xlu0 %286
    %v288 = vadd.f32 %v278, %v285
    %v289 = vadd.f32 %v279, %v287
    %v290 = vsel %vm153, %v288, %v278
    %v291 = vsel %vm153, %v289, %v279
    %v292 = vsel %vm122, 1, 0
    %vm293 = vcmp.eq.s32.totalorder %v292, 1
    %v294 = vsel %vm293, %v290, 0.0
    %v295 = vsel %vm293, %v291, 0.0
    %296 = vadd.xlane.f32.xlu0 %v294
    %v297 = vpop.xlane.xlu0 %296
    %298 = vadd.xlane.f32.xlu0 %v295
    %v299 = vpop.xlane.xlu0 %298
    %v300 = vadd.f32 %v278, %v297
    %v301 = vadd.f32 %v279, %v299
    %v302 = vsel %vm163, %v300, %v290
    %v303 = vsel %vm163, %v301, %v291
    %v304 = vsel %vm124, 1, 0
    %vm305 = vcmp.eq.s32.totalorder %v304, 1
    %v306 = vsel %vm305, %v302, 0.0
    %v307 = vsel %vm305, %v303, 0.0
    %308 = vadd.xlane.f32.xlu0 %v306
    %v309 = vpop.xlane.xlu0 %308
    %310 = vadd.xlane.f32.xlu0 %v307
    %v311 = vpop.xlane.xlu0 %310
    %v312 = vadd.f32 %v278, %v309
    %v313 = vadd.f32 %v279, %v311
    %v314 = vsel %vm173, %v312, %v302
    %v315 = vsel %vm173, %v313, %v303
    %v316 = vsel %vm125, 1, 0
    %vm317 = vcmp.eq.s32.totalorder %v316, 1
    %v318 = vsel %vm317, %v314, 0.0
    %v319 = vsel %vm317, %v315, 0.0
    %320 = vadd.xlane.f32.xlu0 %v318
    %v321 = vpop.xlane.xlu0 %320
    %322 = vadd.xlane.f32.xlu0 %v319
    %v323 = vpop.xlane.xlu0 %322
    %v324 = vadd.f32 %v278, %v321
    %v325 = vadd.f32 %v279, %v323
    %v326 = vsel %vm183, %v324, %v314
    %v327 = vsel %vm183, %v325, %v315
    %v328 = vsel %vm127, 1, 0
    %vm329 = vcmp.eq.s32.totalorder %v328, 1
    %v330 = vsel %vm329, %v326, 0.0
    %v331 = vsel %vm329, %v327, 0.0
    %332 = vadd.xlane.f32.xlu0 %v330
    %v333 = vpop.xlane.xlu0 %332
    %334 = vadd.xlane.f32.xlu0 %v331
    %v335 = vpop.xlane.xlu0 %334
    %v336 = vadd.f32 %v278, %v333
    %v337 = vadd.f32 %v279, %v335
    %v338 = vsel %vm193, %v336, %v326
    %v339 = vsel %vm193, %v337, %v327
    %v340 = vsel %vm128, 1, 0
    %vm341 = vcmp.eq.s32.totalorder %v340, 1
    %v342 = vsel %vm341, %v338, 0.0
    %v343 = vsel %vm341, %v339, 0.0
    %344 = vadd.xlane.f32.xlu0 %v342
    %v345 = vpop.xlane.xlu0 %344
    %346 = vadd.xlane.f32.xlu0 %v343
    %v347 = vpop.xlane.xlu0 %346
    %v348 = vadd.f32 %v278, %v345
    %v349 = vadd.f32 %v279, %v347
    %v350 = vsel %vm203, %v348, %v338
    %v351 = vsel %vm203, %v349, %v339
    %352 = vst [vmem:[#allocation7] sm:$0xff] %v350
    %353 = vst [vmem:[#allocation7 + $0x8] sm:$0xff] %v351
    // Predicated region
    $region22: #{tpu_custom_call.1} parent=1 // pred_check
      _
    $region23: #{tpu_custom_call.1} parent=1 // pred_check_branch
      %355 = sbr.rel (0) target = $region25
    $region24: #{tpu_custom_call.1} parent=1 // pred_region
      %s357 = ssub.s32 256, 256
      %358 = vsyncadd [#allocation4], %s357
      %s359 = sshll.u32 [#allocation7], 4
      %s360 = int_to_ptr.vmem [resolvable:$true] %s359
      %365 = dma.vmem_to_hbm [thread:$0]  %s360, 256, %s3, [#allocation4], 128, 128, 8
    $region25: #{tpu_custom_call.1} parent=1 // pred_fallthru
      _
    // Predicated region
    $region26: #{tpu_custom_call.1} parent=1 // pred_check
      _
    $region27: #{tpu_custom_call.1} parent=1 // pred_check_branch
      %367 = sbr.rel (0) target = $region29
    $region28: #{tpu_custom_call.1} parent=1 // pred_region
      %368 = dma.done [#allocation4], 256
    $region29: #{tpu_custom_call.1} parent=1 // pred_fallthru
      _
    %369 = vsyncpa [#allocation3], 1
    %370 = vsyncpa [#allocation6], 1
    %371 = vsyncpa [#allocation4], 1

</llo_original>
